<compile_context>
chip_gen: v6e
topology: v6e:2x2x1
jax: 0.10.0
libtpu: 0.0.40
codegen_flags: <defaults>
</compile_context>

<pallas_src>
import functools

import jax
import jax.numpy as jnp
from jax.experimental import pallas as pl
from jax.experimental.pallas import tpu as pltpu


def _round_up(x, m):
    return (x + m - 1) // m * m


_MULTI_TC = None


def _num_parallel_cores():
    """2 on megacore-style chips (v4/v5p/v7x), 1 on single-TC chips (v5e/v6e)."""
    global _MULTI_TC
    if _MULTI_TC is None:
        try:
            kind = jax.devices()[0].device_kind.lower()
        except Exception:
            kind = ""
        _MULTI_TC = 2 if any(t in kind for t in ("v7", "v4", "v5p")) else 1
    return _MULTI_TC


# ---------------------------------------------------------------------------
# Pallas kernel 1: matmul with per-output-column scale/bias (+ReLU) epilogue
# ---------------------------------------------------------------------------
def _matmul_bias_kernel(a_ref, b_ref, s_ref, c_ref, o_ref, *, relu):
    # Single K block: accumulate in registers, no scratch round trip.
    out = jnp.dot(a_ref[...], b_ref[...], preferred_element_type=jnp.float32)
    out = out * s_ref[...] + c_ref[...]
    if relu:
        out = jnp.maximum(out, 0.0)
    o_ref[...] = out.astype(o_ref.dtype)


def _matmul_acc_kernel(a_ref, b_ref, s_ref, c_ref, o_ref, acc_ref, *, relu):
    @pl.when(pl.program_id(2) == 0)
    def _():
        acc_ref[...] = jnp.zeros_like(acc_ref)

    acc_ref[...] += jnp.dot(a_ref[...], b_ref[...],
                            preferred_element_type=jnp.float32)

    @pl.when(pl.program_id(2) == pl.num_programs(2) - 1)
    def _():
        out = acc_ref[...] * s_ref[...] + c_ref[...]
        if relu:
            out = jnp.maximum(out, 0.0)
        o_ref[...] = out.astype(o_ref.dtype)


def matmul_scale_bias(a, b, scale=None, bias=None, relu=False,
                      out_dtype=jnp.float32, compute_dtype=jnp.bfloat16,
                      tm_max=256, tk_max=512, tn_max=512):
    """relu?((a @ b) * scale + bias); scale/bias broadcast over output columns.

    M/K at or below the caps get one full-extent block (legal under the
    (8,128) rule; avoids host-side zero-pad copies).  The output N axis is
    ALWAYS padded to a multiple of 128 so the store path is lane-dense (full
    vst, no masked partial stores) — the padded columns carry zero weights /
    scale / bias and are sliced off after the call.  K never has a partial
    block so padded columns contribute exact zeros.  Current caps keep blocks
    small enough for v7x's 64 MiB VMEM with double-buffering.
    """
    M, K = a.shape
    K2, N = b.shape
    assert K == K2
    assert tn_max % 128 == 0
    if scale is None:
        scale = jnp.ones((N,), jnp.float32)
    if bias is None:
        bias = jnp.zeros((N,), jnp.float32)

    def plan(d, cap):
        if d <= cap:
            return d, d            # full-extent block, no padding
        return cap, _round_up(d, cap)

    tm, Mp = plan(M, tm_max)
    tk, Kp = plan(K, tk_max)
    if N <= tn_max:                # lane-dense: pad N up to a 128 multiple
        tn = Np = max(_round_up(N, 128), 128)
    else:
        tn, Np = tn_max, _round_up(N, tn_max)

    a_c = a.astype(compute_dtype)
    b_c = b.astype(compute_dtype)
    if (Mp, Kp) != (M, K):
        a_c = jnp.zeros((Mp, Kp), compute_dtype).at[:M, :K].set(a_c)
    if (Kp, Np) != (K, N):
        b_c = jnp.zeros((Kp, Np), compute_dtype).at[:K, :N].set(b_c)
    s_c = scale.astype(jnp.float32).reshape(1, N)
    c_c = bias.astype(jnp.float32).reshape(1, N)
    if Np != N:
        s_c = jnp.zeros((1, Np), jnp.float32).at[:, :N].set(s_c)
        c_c = jnp.zeros((1, Np), jnp.float32).at[:, :N].set(c_c)

    if Kp // tk == 1:
        out = pl.pallas_call(
            functools.partial(_matmul_bias_kernel, relu=relu),
            out_shape=jax.ShapeDtypeStruct((Mp, Np), out_dtype),
            grid_spec=pltpu.PrefetchScalarGridSpec(
                num_scalar_prefetch=0,
                grid=(Mp // tm, Np // tn),
                in_specs=[
                    pl.BlockSpec((tm, tk), lambda i, j: (i, 0)),
                    pl.BlockSpec((tk, tn), lambda i, j: (0, j)),
                    pl.BlockSpec((1, tn), lambda i, j: (0, j)),
                    pl.BlockSpec((1, tn), lambda i, j: (0, j)),
                ],
                out_specs=pl.BlockSpec((tm, tn), lambda i, j: (i, j)),
            ),
            compiler_params=pltpu.CompilerParams(
                dimension_semantics=("parallel", "parallel")),
        )(a_c, b_c, s_c, c_c)
    else:
        out = pl.pallas_call(
            functools.partial(_matmul_acc_kernel, relu=relu),
            out_shape=jax.ShapeDtypeStruct((Mp, Np), out_dtype),
            grid_spec=pltpu.PrefetchScalarGridSpec(
                num_scalar_prefetch=0,
                grid=(Mp // tm, Np // tn, Kp // tk),
                in_specs=[
                    pl.BlockSpec((tm, tk), lambda i, j, k: (i, k)),
                    pl.BlockSpec((tk, tn), lambda i, j, k: (k, j)),
                    pl.BlockSpec((1, tn), lambda i, j, k: (0, j)),
                    pl.BlockSpec((1, tn), lambda i, j, k: (0, j)),
                ],
                out_specs=pl.BlockSpec((tm, tn), lambda i, j, k: (i, j)),
                scratch_shapes=[pltpu.VMEM((tm, tn), jnp.float32)],
            ),
            compiler_params=pltpu.CompilerParams(
                dimension_semantics=("parallel", "parallel", "arbitrary")),
        )(a_c, b_c, s_c, c_c)

    if (Mp, Np) != (M, N):
        out = out[:M, :N]
    return out


# ---------------------------------------------------------------------------
# Pallas kernel 2: fused attention  softmax(q k^T * scale) @ v, heads batched
# ---------------------------------------------------------------------------
def _attn_kernel(q_ref, k_ref, v_ref, o_ref, *, scale, n_valid):
    q = q_ref[...].astype(jnp.bfloat16)
    k = k_ref[...].astype(jnp.bfloat16)
    s = jnp.einsum('bqd,bkd->bqk', q, k,
                   preferred_element_type=jnp.float32) * scale
    if n_valid is not None:
        key_idx = jax.lax.broadcasted_iota(jnp.int32, s.shape, 2)
        s = jnp.where(key_idx < n_valid, s, -1e30)
    s = s - jnp.max(s, axis=-1, keepdims=True)
    p = jnp.exp(s)
    p = p * pl.reciprocal(jnp.sum(p, axis=-1, keepdims=True), approx=True)
    o = jnp.einsum('bqk,bkd->bqd', p.astype(jnp.bfloat16),
                   v_ref[...].astype(jnp.bfloat16),
                   preferred_element_type=jnp.float32)
    o_ref[...] = o.astype(o_ref.dtype)


def _attn_kernel_dual(q_ref, k_ref, va_ref, vb_ref, oa_ref, ob_ref, *,
                      scale, n_valid):
    # softmax(q k^T) computed once, applied to two value tensors (general path;
    # mirrors the original module's attn_x2 = softmax(dots_x1) quirk).
    q = q_ref[...].astype(jnp.bfloat16)
    k = k_ref[...].astype(jnp.bfloat16)
    s = jnp.einsum('bqd,bkd->bqk', q, k,
                   preferred_element_type=jnp.float32) * scale
    if n_valid is not None:
        key_idx = jax.lax.broadcasted_iota(jnp.int32, s.shape, 2)
        s = jnp.where(key_idx < n_valid, s, -1e30)
    s = s - jnp.max(s, axis=-1, keepdims=True)
    p = jnp.exp(s)
    p = p * pl.reciprocal(jnp.sum(p, axis=-1, keepdims=True), approx=True)
    p16 = p.astype(jnp.bfloat16)
    oa_ref[...] = jnp.einsum('bqk,bkd->bqd', p16,
                             va_ref[...].astype(jnp.bfloat16),
                             preferred_element_type=jnp.float32
                             ).astype(oa_ref.dtype)
    ob_ref[...] = jnp.einsum('bqk,bkd->bqd', p16,
                             vb_ref[...].astype(jnp.bfloat16),
                             preferred_element_type=jnp.float32
                             ).astype(ob_ref.dtype)


def _attn_block(bh):
    # Single block on 1-TC chips (v5e/v6e: grid steps are serial, just per-step
    # overhead); 2 balanced blocks on megacore chips (v4/v5p/v7x).
    cores = _num_parallel_cores()
    if cores > 1 and bh % cores == 0:
        return bh // cores
    return bh


def _pad_seq(x, n_pad):
    bh, n, d = x.shape
    if n_pad == n:
        return x
    return jnp.pad(x, ((0, 0), (0, n_pad - n), (0, 0)))


def attention_pallas(q, k, v, scale):
    # q, k, v: (B*heads, n, d), bf16 (or f32; cast inside kernel)
    BH, n, d = q.shape
    n_pad = _round_up(n, 8)
    n_valid = n if n_pad != n else None
    qp, kp, vp = (_pad_seq(t, n_pad) for t in (q, k, v))
    blk = _attn_block(BH)
    spec = pl.BlockSpec((blk, n_pad, d), lambda i: (i, 0, 0))
    out = pl.pallas_call(
        functools.partial(_attn_kernel, scale=scale, n_valid=n_valid),
        out_shape=jax.ShapeDtypeStruct((BH, n_pad, d), jnp.bfloat16),
        grid_spec=pltpu.PrefetchScalarGridSpec(
            num_scalar_prefetch=0, grid=(BH // blk,),
            in_specs=[spec] * 3, out_specs=spec),
        compiler_params=pltpu.CompilerParams(dimension_semantics=("parallel",)),
    )(qp, kp, vp)
    return out[:, :n, :]


def attention_pallas_dual(q, k, va, vb, scale):
    BH, n, d = q.shape
    n_pad = _round_up(n, 8)
    n_valid = n if n_pad != n else None
    qp, kp, vap, vbp = (_pad_seq(t, n_pad) for t in (q, k, va, vb))
    blk = _attn_block(BH)
    spec = pl.BlockSpec((blk, n_pad, d), lambda i: (i, 0, 0))
    oa, ob = pl.pallas_call(
        functools.partial(_attn_kernel_dual, scale=scale, n_valid=n_valid),
        out_shape=(jax.ShapeDtypeStruct((BH, n_pad, d), jnp.bfloat16),
                   jax.ShapeDtypeStruct((BH, n_pad, d), jnp.bfloat16)),
        grid_spec=pltpu.PrefetchScalarGridSpec(
            num_scalar_prefetch=0, grid=(BH // blk,),
            in_specs=[spec] * 4, out_specs=[spec, spec]),
        compiler_params=pltpu.CompilerParams(dimension_semantics=("parallel",)),
    )(qp, kp, vap, vbp)
    return oa[:, :n, :], ob[:, :n, :]


# ---------------------------------------------------------------------------
# Glue: im2col conv (NHWC), BN folding, bilinear resize (align_corners=False)
# ---------------------------------------------------------------------------
def bn_fold(gamma, beta, mean, var, eps=1e-5):
    scale = gamma / jnp.sqrt(var + eps)
    bias = beta - mean * scale
    return scale, bias


def _im2col(x, kh, kw, padding):
    B, H, W, C = x.shape
    if kh == 1 and kw == 1 and padding == 0:
        return x.reshape(B * H * W, C)
    # TODO(synk): for large feature maps, move this window gather into the
    # matmul kernel via a grid axis over kh*kw; at 7x7 it is a few KB and cheap.
    xp = jnp.pad(x, ((0, 0), (padding, padding), (padding, padding), (0, 0)))
    assert xp.shape[1] - kh + 1 == H and xp.shape[2] - kw + 1 == W
    cols = [xp[:, dy:dy + H, dx:dx + W, :]
            for dy in range(kh) for dx in range(kw)]
    return jnp.concatenate(cols, axis=-1).reshape(B * H * W, kh * kw * C)


def _w_mat(w):
    # PyTorch (Cout, Cin, kh, kw) -> (kh*kw*Cin, Cout), matching im2col order.
    Co, Ci, kh, kw = w.shape
    if kh == 1 and kw == 1:
        return w[:, :, 0, 0].T
    return w.transpose(2, 3, 1, 0).reshape(kh * kw * Ci, Co)


def conv2d_pallas(x, w, scale=None, bias=None, relu=False, padding=0):
    # x: (B, H, W, Cin) NHWC; w: (Cout, Cin, kh, kw); stride 1, bias-free conv
    # with fused folded-BN scale/bias (+ReLU) epilogue.
    B, H, W, C = x.shape
    Co, Ci, kh, kw = w.shape
    assert Ci == C
    a = _im2col(x, kh, kw, padding)
    out = matmul_scale_bias(a, _w_mat(w), scale, bias, relu=relu)
    return out.reshape(B, H, W, Co)


def conv2d_pallas_pair(x1, w1, s1, b1, x2, w2, s2, b2, relu=False, padding=0):
    """Two same-shaped convs fused into ONE Pallas matmul launch.

    im2col blocks stacked along M, weights concatenated along N; the off-block
    outputs are discarded (free: N is padded to 128 lanes either way)."""
    B, H, W, C = x1.shape
    Co, Ci, kh, kw = w1.shape
    assert x2.shape == x1.shape and w2.shape == w1.shape and Ci == C
    a = jnp.concatenate([_im2col(x1, kh, kw, padding),
                         _im2col(x2, kh, kw, padding)], axis=0)
    bmat = jnp.concatenate([_w_mat(w1), _w_mat(w2)], axis=1)   # (K, 2*Co)
    scale = jnp.concatenate([s1, s2])
    bias = jnp.concatenate([b1, b2])
    out = matmul_scale_bias(a, bmat, scale, bias, relu=relu)
    M = B * H * W
    y1 = out[:M, :Co].reshape(B, H, W, Co)
    y2 = out[M:, Co:].reshape(B, H, W, Co)
    return y1, y2


def interpolate_bilinear_nhwc(x, out_h, out_w):
    # F.interpolate(mode='bilinear', align_corners=False), NHWC layout.
    B, H, W, C = x.shape

    def src_idx(out_size, in_size):
        scale = in_size / out_size
        i = jnp.arange(out_size, dtype=jnp.float32)
        s = jnp.maximum((i + 0.5) * scale - 0.5, 0.0)
        i0 = jnp.floor(s)
        frac = s - i0
        i0 = i0.astype(jnp.int32)
        i1 = jnp.minimum(i0 + 1, in_size - 1)
        i0 = jnp.minimum(i0, in_size - 1)
        return i0, i1, frac

    y0, y1, fy = src_idx(out_h, H)
    x0, x1, fx = src_idx(out_w, W)
    r0 = x[:, y0, :, :]                               # (B, out_h, W, C)
    r1 = x[:, y1, :, :]
    wx1 = fx[None, None, :, None]
    wx0 = 1.0 - wx1
    top = r0[:, :, x0, :] * wx0 + r0[:, :, x1, :] * wx1
    bot = r1[:, :, x0, :] * wx0 + r1[:, :, x1, :] * wx1
    wy1 = fy[None, :, None, None]
    return top * (1.0 - wy1) + bot * wy1


# ---------------------------------------------------------------------------
# Sub-modules (NHWC)
# ---------------------------------------------------------------------------
def spatial_attention(x, p):
    # x: (B, H, W, C)
    B, H, W, C = x.shape
    ah = jnp.mean(x, axis=2)                          # (B,H,C) == avg_pool2d(x,[1,w])
    aw = jnp.mean(x, axis=1)                          # (B,W,C) == avg_pool2d(x,[h,1])
    w_sh = p['conv_sh_w'][:, :, 0, 0]                 # (C, C); F.conv2d uses no bias
    s1, b1 = bn_fold(*p['bn_sh1'])
    s2, b2 = bn_fold(*p['bn_sh2'])

    # Identical weight for both projections -> one Pallas launch on the stacked
    # rows; per-branch BN scale/bias applied afterwards (tiny XLA elementwise).
    stacked = jnp.concatenate([ah.reshape(B * H, C), aw.reshape(B * W, C)], axis=0)
    proj = matmul_scale_bias(stacked, w_sh.T)
    ah2 = (proj[:B * H] * s1[None, :] + b1[None, :]).reshape(B, H, C)
    aw2 = (proj[B * H:] * s2[None, :] + b2[None, :]).reshape(B, W, C)

    # matmul (H,1)x(1,W) then softmax over channels (faithful to the module).
    att = jax.nn.softmax(ah2[:, :, None, :] * aw2[:, None, :, :], axis=-1)  # (B,H,W,C)
    attt1 = att[..., 0:1]
    attt2 = att[..., 1:2]
    fusion = attt1 * ah2[:, :, None, :] + attt2 * aw2[:, None, :, :]
    out = conv2d_pallas(fusion, p['fuse_w'], relu=False, padding=0)
    # TODO(synk): dropout(p=0.15) is identity in eval mode; training-mode RNG not implemented.
    gamma = p['gamma']
    return jax.nn.relu(gamma * out + (1.0 - gamma) * x)


def attention_module(x1, x2, p, heads, dim_head, resolution):
    B, n, dim = x1.shape
    scale = dim_head ** (-0.5)
    inner = heads * dim_head
    Wqkv = p['to_qkv_w']          # (3*inner, dim), no bias
    Wout = p['to_out_w']          # (dim, inner)
    bout = p['to_out_b']          # (dim,)
    # qkv output width = 3*inner (1536).  One full-width N block on 1-TC chips;
    # two balanced tiles on megacore chips (avoids 2-vs-1 imbalance of 512s).
    tn_qkv = max(_round_up((3 * inner) // _num_parallel_cores(), 128), 128)

    def qkv(x):
        # Emit q/k/v directly in bf16: halves DMA bytes into the attention kernel.
        flat = matmul_scale_bias(x.reshape(B * n, dim), Wqkv.T,
                                 out_dtype=jnp.bfloat16, tn_max=tn_qkv)
        flat = flat.reshape(B, n, 3 * inner)
        q, k, v = jnp.split(flat, 3, axis=-1)

        def r(t):
            return (t.reshape(B, n, heads, dim_head)
                     .transpose(0, 2, 1, 3)
                     .reshape(B * heads, n, dim_head))
        return r(q), r(k), r(v)

    def proj(o):
        o = (o.reshape(B, heads, n, dim_head)
              .transpose(0, 2, 1, 3)
              .reshape(B * n, inner))
        o = matmul_scale_bias(o, Wout.T, None, bout)
        return o.reshape(B, n, resolution, resolution)

    if x1 is x2:
        # Dedup: inputs alias, so qkv(x1) == qkv(x2) and v1 == v2; with the
        # module quirk attn_x2 = softmax(dots_x1), both outputs are identical.
        # One qkv matmul, one attention kernel, one projection.
        q, k, v = qkv(x1)
        o = attention_pallas(q, k, v, scale)
        out = proj(o)
        return out, out

    # General path: P = softmax(q1 k2^T) computed once, applied to v2 and v1.
    q1, k1, v1 = qkv(x1)
    q2, k2, v2 = qkv(x2)
    o1, o2 = attention_pallas_dual(q1, k2, v2, v1, scale)
    return proj(o1), proj(o2)


# ---------------------------------------------------------------------------
# PyrmidFusionNet forward (NCHW interface, NHWC internals)
# ---------------------------------------------------------------------------
def pyrmid_fusion_net(x_high, x_low, params):
    B, _, h, w = x_low.shape
    x_low_n = jnp.transpose(x_low, (0, 2, 3, 1))      # NHWC
    x_high_n = jnp.transpose(x_high, (0, 2, 3, 1))

    s, b = bn_fold(*params['lateral_low_bn'])
    lat_low = conv2d_pallas(x_low_n, params['lateral_low_w'], s, b, relu=True, padding=1)

    high_up1 = interpolate_bilinear_nhwc(x_high_n, h, w)
    concate = jnp.concatenate([lat_low, high_up1], axis=-1)

    s, b = bn_fold(*params['frb1_bn'])
    concate = conv2d_pallas(concate, params['frb1_w'], s, b, relu=True, padding=0)
    s, b = bn_fold(*params['frb2_bn'])
    concate = conv2d_pallas(concate, params['frb2_w'], s, b, relu=True, padding=1)

    # conv_high + conv_low: same shapes -> one fused Pallas launch.
    sh, bh_ = bn_fold(*params['conv_high_bn'])
    sl, bl = bn_fold(*params['conv_low_bn'])
    conv_high, conv_low = conv2d_pallas_pair(
        high_up1, params['conv_high_w'], sh, bh_,
        lat_low, params['conv_low_w'], sl, bl,
        relu=True, padding=1)

    sa = spatial_attention(concate, params['sa'])     # (B, H, W, C)
    Bs, Hs, Ws, Cs = sa.shape
    sa_flat = jnp.transpose(sa, (0, 3, 1, 2)).reshape(Bs, Cs, Hs * Ws)
    # NOTE: in the original module `ca = self.ca(concate)` is immediately
    # overwritten by `ca = sa.view(...)`, so ChannelWise never affects the
    # output; its computation is skipped here (dead code).
    ca_flat = sa_flat                                  # alias -> dedup in attention_module

    ca_output, sa_out_put = attention_module(
        ca_flat, sa_flat, params['att'], heads=8, dim_head=64, resolution=Hs)

    # attention outputs are (B, C, res, res) NCHW -> NHWC for the fused blend
    sa_out_n = jnp.transpose(sa_out_put, (0, 2, 3, 1))
    ca_out_n = jnp.transpose(ca_output, (0, 2, 3, 1))

    # a*b + c*d on a few-KB tensor: let XLA fuse it rather than paying a
    # pallas_call launch + narrow stores.
    att_out = sa_out_n * conv_high + ca_out_n * conv_low

    s, b = bn_fold(*params['apf_bn'])
    apf = conv2d_pallas(att_out, params['apf_w'], s, b, relu=True, padding=1)
    return jnp.transpose(apf, (0, 3, 1, 2))            # back to NCHW


# ---------------------------------------------------------------------------
# Deterministic parameter init (shapes per the module's __init__; eval-mode BN)
# ---------------------------------------------------------------------------
def init_params(key, ch_high, ch_low, ch_out, s_stride):
    dim = (224 // s_stride) ** 2
    inner = 8 * 64
    keys = list(jax.random.split(key, 64))
    it = iter(keys)

    def w(shape, scale=0.1):
        return scale * jax.random.normal(next(it), shape, jnp.float32)

    def bn(c):
        return (1.0 + 0.1 * jax.random.normal(next(it), (c,), jnp.float32),
                0.1 * jax.random.normal(next(it), (c,), jnp.float32),
                0.1 * jax.random.normal(next(it), (c,), jnp.float32),
                1.0 + 0.1 * jnp.abs(jax.random.normal(next(it), (c,), jnp.float32)))

    return {
        'lateral_low_w': w((ch_low, ch_high, 3, 3)),
        'lateral_low_bn': bn(ch_low),
        'frb1_w': w((ch_out, 2 * ch_low, 1, 1)),
        'frb1_bn': bn(ch_out),
        'frb2_w': w((ch_out, ch_out, 3, 3)),
        'frb2_bn': bn(ch_out),
        'conv_high_w': w((ch_out, ch_low, 3, 3)),
        'conv_high_bn': bn(ch_out),
        'conv_low_w': w((ch_out, ch_low, 3, 3)),
        'conv_low_bn': bn(ch_out),
        'sa': {
            'conv_sh_w': w((ch_out, ch_out, 1, 1)),
            'bn_sh1': bn(ch_out),
            'bn_sh2': bn(ch_out),
            'fuse_w': w((ch_out, ch_out, 1, 1)),
            'gamma': jnp.zeros((1,), jnp.float32),     # module inits gamma = 0
        },
        'att': {
            'to_qkv_w': w((3 * inner, dim)),
            'to_out_w': w((dim, inner)),
            'to_out_b': w((dim,)),
        },
        'apf_w': w((ch_out, ch_out, 3, 3)),
        'apf_bn': bn(ch_out),
        # classifier / ChannelWise / conv_res parameters are unused in forward.
    }


if __name__ == "__main__":
    key = jax.random.PRNGKey(0)
    k1, k2, k3 = jax.random.split(key, 3)

    ch_high, ch_low, ch_out, s_stride = 8, 8, 16, 32
    res = 224 // s_stride   # 7: the Attention block requires H*W == (224/s)^2

    # x_low carries `channels_high` channels, x_high carries `channels_low`
    # channels (this is what the module's conv in/out channels imply).
    x_low = jax.random.normal(k1, (2, ch_high, res, res), jnp.float32)
    x_high = jax.random.normal(k2, (2, ch_low, 4, 4), jnp.float32)
    params = init_params(k3, ch_high, ch_low, ch_out, s_stride)

    fwd = jax.jit(pyrmid_fusion_net)
    out = fwd(x_high, x_low, params)
    out = jax.block_until_ready(out)
    assert out.shape == (2, ch_out, res, res), out.shape
    assert bool(jnp.all(jnp.isfinite(out)))
    print("KERNEL_OK")
</pallas_src>

<mosaic_0001>
module attributes {stable_mosaic.version = 11 : i64} {
  func.func @_matmul_bias_kernel(%arg0: i32, %arg1: i32, %arg2: memref<98x72xbf16, #tpu.memory_space<vmem>>, %arg3: memref<72x128xbf16, #tpu.memory_space<vmem>>, %arg4: memref<1x128xf32, #tpu.memory_space<vmem>>, %arg5: memref<1x128xf32, #tpu.memory_space<vmem>>, %arg6: memref<98x128xf32, #tpu.memory_space<vmem>>) attributes {dimension_semantics = [#tpu.dimension_semantics<parallel>, #tpu.dimension_semantics<parallel>], iteration_bounds = array<i64: 1, 1>, scalar_prefetch = 0 : i64, scratch_operands = 0 : i64, tpu.core_type = #tpu.core_type<tc>, window_params = [{transform_indices = @transform_0, window_bounds = array<i64: 98, 72>}, {transform_indices = @transform_1, window_bounds = array<i64: 72, 128>}, {transform_indices = @transform_2, window_bounds = array<i64: 1, 128>}, {transform_indices = @transform_3, window_bounds = array<i64: 1, 128>}, {transform_indices = @transform_4, window_bounds = array<i64: 98, 128>}]} {
    %c0 = arith.constant 0 : index
    %c0_0 = arith.constant 0 : index
    %0 = vector.load %arg2[%c0, %c0_0] : memref<98x72xbf16, #tpu.memory_space<vmem>>, vector<98x72xbf16>
    %c0_1 = arith.constant 0 : index
    %c0_2 = arith.constant 0 : index
    %1 = vector.load %arg3[%c0_1, %c0_2] : memref<72x128xbf16, #tpu.memory_space<vmem>>, vector<72x128xbf16>
    %cst = arith.constant dense<0.000000e+00> : vector<98x128xf32>
    %2 = tpu.matmul %0, %1, %cst {dimension_numbers = #tpu.dot_dimension_numbers<[1], [0], [0], [1], [0, 0, 1, 1], [], []>} : vector<98x72xbf16>, vector<72x128xbf16>, vector<98x128xf32> -> vector<98x128xf32>
    %c0_3 = arith.constant 0 : index
    %c0_4 = arith.constant 0 : index
    %3 = vector.load %arg4[%c0_3, %c0_4] : memref<1x128xf32, #tpu.memory_space<vmem>>, vector<1x128xf32>
    %4 = vector.broadcast %3 : vector<1x128xf32> to vector<98x128xf32>
    %5 = arith.mulf %2, %4 : vector<98x128xf32>
    %c0_5 = arith.constant 0 : index
    %c0_6 = arith.constant 0 : index
    %6 = vector.load %arg5[%c0_5, %c0_6] : memref<1x128xf32, #tpu.memory_space<vmem>>, vector<1x128xf32>
    %7 = vector.broadcast %6 : vector<1x128xf32> to vector<98x128xf32>
    %8 = arith.addf %5, %7 : vector<98x128xf32>
    %cst_7 = arith.constant 0.000000e+00 : f32
    %9 = vector.broadcast %cst_7 : f32 to vector<98x128xf32>
    %10 = arith.maximumf %8, %9 : vector<98x128xf32>
    %c0_8 = arith.constant 0 : index
    %c0_9 = arith.constant 0 : index
    %11 = vector.load %arg6[%c0_8, %c0_9] : memref<98x128xf32, #tpu.memory_space<vmem>>, vector<98x128xf32>
    tpu.vector_store %arg6[%c0_8, %c0_9], %10 {strides = array<i32>} : memref<98x128xf32, #tpu.memory_space<vmem>>, vector<98x128xf32>,
    return
  }
  func.func @transform_0(%arg0: i32, %arg1: i32) -> (i32, i32) {
    %c0_i32 = arith.constant 0 : i32
    %c0_i32_0 = arith.constant 0 : i32
    return %arg0, %c0_i32 : i32, i32
  }
  func.func @transform_1(%arg0: i32, %arg1: i32) -> (i32, i32) {
    %c0_i32 = arith.constant 0 : i32
    %c0_i32_0 = arith.constant 0 : i32
    return %c0_i32, %arg1 : i32, i32
  }
  func.func @transform_2(%arg0: i32, %arg1: i32) -> (i32, i32) {
    %c0_i32 = arith.constant 0 : i32
    %c0_i32_0 = arith.constant 0 : i32
    return %c0_i32, %arg1 : i32, i32
  }
  func.func @transform_3(%arg0: i32, %arg1: i32) -> (i32, i32) {
    %c0_i32 = arith.constant 0 : i32
    %c0_i32_0 = arith.constant 0 : i32
    return %c0_i32, %arg1 : i32, i32
  }
  func.func @transform_4(%arg0: i32, %arg1: i32) -> (i32, i32) {
    %c0_i32 = arith.constant 0 : i32
    return %arg0, %arg1 : i32, i32
  }
}

module attributes {stable_mosaic.version = 11 : i64} {
  func.func @_matmul_bias_kernel(%arg0: i32, %arg1: i32, %arg2: memref<196x72xbf16, #tpu.memory_space<vmem>>, %arg3: memref<72x128xbf16, #tpu.memory_space<vmem>>, %arg4: memref<1x128xf32, #tpu.memory_space<vmem>>, %arg5: memref<1x128xf32, #tpu.memory_space<vmem>>, %arg6: memref<196x128xf32, #tpu.memory_space<vmem>>) attributes {dimension_semantics = [#tpu.dimension_semantics<parallel>, #tpu.dimension_semantics<parallel>], iteration_bounds = array<i64: 1, 1>, scalar_prefetch = 0 : i64, scratch_operands = 0 : i64, tpu.core_type = #tpu.core_type<tc>, window_params = [{transform_indices = @transform_0, window_bounds = array<i64: 196, 72>}, {transform_indices = @transform_1, window_bounds = array<i64: 72, 128>}, {transform_indices = @transform_2, window_bounds = array<i64: 1, 128>}, {transform_indices = @transform_3, window_bounds = array<i64: 1, 128>}, {transform_indices = @transform_4, window_bounds = array<i64: 196, 128>}]} {
    %c0 = arith.constant 0 : index
    %c0_0 = arith.constant 0 : index
    %0 = vector.load %arg2[%c0, %c0_0] : memref<196x72xbf16, #tpu.memory_space<vmem>>, vector<196x72xbf16>
    %c0_1 = arith.constant 0 : index
    %c0_2 = arith.constant 0 : index
    %1 = vector.load %arg3[%c0_1, %c0_2] : memref<72x128xbf16, #tpu.memory_space<vmem>>, vector<72x128xbf16>
    %cst = arith.constant dense<0.000000e+00> : vector<196x128xf32>
    %2 = tpu.matmul %0, %1, %cst {dimension_numbers = #tpu.dot_dimension_numbers<[1], [0], [0], [1], [0, 0, 1, 1], [], []>} : vector<196x72xbf16>, vector<72x128xbf16>, vector<196x128xf32> -> vector<196x128xf32>
    %c0_3 = arith.constant 0 : index
    %c0_4 = arith.constant 0 : index
    %3 = vector.load %arg4[%c0_3, %c0_4] : memref<1x128xf32, #tpu.memory_space<vmem>>, vector<1x128xf32>
    %4 = vector.broadcast %3 : vector<1x128xf32> to vector<196x128xf32>
    %5 = arith.mulf %2, %4 : vector<196x128xf32>
    %c0_5 = arith.constant 0 : index
    %c0_6 = arith.constant 0 : index
    %6 = vector.load %arg5[%c0_5, %c0_6] : memref<1x128xf32, #tpu.memory_space<vmem>>, vector<1x128xf32>
    %7 = vector.broadcast %6 : vector<1x128xf32> to vector<196x128xf32>
    %8 = arith.addf %5, %7 : vector<196x128xf32>
    %cst_7 = arith.constant 0.000000e+00 : f32
    %9 = vector.broadcast %cst_7 : f32 to vector<196x128xf32>
    %10 = arith.maximumf %8, %9 : vector<196x128xf32>
    %c0_8 = arith.constant 0 : index
    %c0_9 = arith.constant 0 : index
    %11 = vector.load %arg6[%c0_8, %c0_9] : memref<196x128xf32, #tpu.memory_space<vmem>>, vector<196x128xf32>
    tpu.vector_store %arg6[%c0_8, %c0_9], %10 {strides = array<i32>} : memref<196x128xf32, #tpu.memory_space<vmem>>, vector<196x128xf32>,
    return
  }
  func.func @transform_0(%arg0: i32, %arg1: i32) -> (i32, i32) {
    %c0_i32 = arith.constant 0 : i32
    %c0_i32_0 = arith.constant 0 : i32
    return %arg0, %c0_i32 : i32, i32
  }
  func.func @transform_1(%arg0: i32, %arg1: i32) -> (i32, i32) {
    %c0_i32 = arith.constant 0 : i32
    %c0_i32_0 = arith.constant 0 : i32
    return %c0_i32, %arg1 : i32, i32
  }
  func.func @transform_2(%arg0: i32, %arg1: i32) -> (i32, i32) {
    %c0_i32 = arith.constant 0 : i32
    %c0_i32_0 = arith.constant 0 : i32
    return %c0_i32, %arg1 : i32, i32
  }
  func.func @transform_3(%arg0: i32, %arg1: i32) -> (i32, i32) {
    %c0_i32 = arith.constant 0 : i32
    %c0_i32_0 = arith.constant 0 : i32
    return %c0_i32, %arg1 : i32, i32
  }
  func.func @transform_4(%arg0: i32, %arg1: i32) -> (i32, i32) {
    %c0_i32 = arith.constant 0 : i32
    return %arg0, %arg1 : i32, i32
  }
}

module attributes {stable_mosaic.version = 11 : i64} {
  func.func @_matmul_bias_kernel(%arg0: i32, %arg1: i32, %arg2: memref<98x16xbf16, #tpu.memory_space<vmem>>, %arg3: memref<16x128xbf16, #tpu.memory_space<vmem>>, %arg4: memref<1x128xf32, #tpu.memory_space<vmem>>, %arg5: memref<1x128xf32, #tpu.memory_space<vmem>>, %arg6: memref<98x128xf32, #tpu.memory_space<vmem>>) attributes {dimension_semantics = [#tpu.dimension_semantics<parallel>, #tpu.dimension_semantics<parallel>], iteration_bounds = array<i64: 1, 1>, scalar_prefetch = 0 : i64, scratch_operands = 0 : i64, tpu.core_type = #tpu.core_type<tc>, window_params = [{transform_indices = @transform_0, window_bounds = array<i64: 98, 16>}, {transform_indices = @transform_1, window_bounds = array<i64: 16, 128>}, {transform_indices = @transform_2, window_bounds = array<i64: 1, 128>}, {transform_indices = @transform_3, window_bounds = array<i64: 1, 128>}, {transform_indices = @transform_4, window_bounds = array<i64: 98, 128>}]} {
    %c0 = arith.constant 0 : index
    %c0_0 = arith.constant 0 : index
    %0 = vector.load %arg2[%c0, %c0_0] : memref<98x16xbf16, #tpu.memory_space<vmem>>, vector<98x16xbf16>
    %c0_1 = arith.constant 0 : index
    %c0_2 = arith.constant 0 : index
    %1 = vector.load %arg3[%c0_1, %c0_2] : memref<16x128xbf16, #tpu.memory_space<vmem>>, vector<16x128xbf16>
    %cst = arith.constant dense<0.000000e+00> : vector<98x128xf32>
    %2 = tpu.matmul %0, %1, %cst {dimension_numbers = #tpu.dot_dimension_numbers<[1], [0], [0], [1], [0, 0, 1, 1], [], []>} : vector<98x16xbf16>, vector<16x128xbf16>, vector<98x128xf32> -> vector<98x128xf32>
    %c0_3 = arith.constant 0 : index
    %c0_4 = arith.constant 0 : index
    %3 = vector.load %arg4[%c0_3, %c0_4] : memref<1x128xf32, #tpu.memory_space<vmem>>, vector<1x128xf32>
    %4 = vector.broadcast %3 : vector<1x128xf32> to vector<98x128xf32>
    %5 = arith.mulf %2, %4 : vector<98x128xf32>
    %c0_5 = arith.constant 0 : index
    %c0_6 = arith.constant 0 : index
    %6 = vector.load %arg5[%c0_5, %c0_6] : memref<1x128xf32, #tpu.memory_space<vmem>>, vector<1x128xf32>
    %7 = vector.broadcast %6 : vector<1x128xf32> to vector<98x128xf32>
    %8 = arith.addf %5, %7 : vector<98x128xf32>
    %cst_7 = arith.constant 0.000000e+00 : f32
    %9 = vector.broadcast %cst_7 : f32 to vector<98x128xf32>
    %10 = arith.maximumf %8, %9 : vector<98x128xf32>
    %c0_8 = arith.constant 0 : index
    %c0_9 = arith.constant 0 : index
    %11 = vector.load %arg6[%c0_8, %c0_9] : memref<98x128xf32, #tpu.memory_space<vmem>>, vector<98x128xf32>
    tpu.vector_store %arg6[%c0_8, %c0_9], %10 {strides = array<i32>} : memref<98x128xf32, #tpu.memory_space<vmem>>, vector<98x128xf32>,
    return
  }
  func.func @transform_0(%arg0: i32, %arg1: i32) -> (i32, i32) {
    %c0_i32 = arith.constant 0 : i32
    %c0_i32_0 = arith.constant 0 : i32
    return %arg0, %c0_i32 : i32, i32
  }
  func.func @transform_1(%arg0: i32, %arg1: i32) -> (i32, i32) {
    %c0_i32 = arith.constant 0 : i32
    %c0_i32_0 = arith.constant 0 : i32
    return %c0_i32, %arg1 : i32, i32
  }
  func.func @transform_2(%arg0: i32, %arg1: i32) -> (i32, i32) {
    %c0_i32 = arith.constant 0 : i32
    %c0_i32_0 = arith.constant 0 : i32
    return %c0_i32, %arg1 : i32, i32
  }
  func.func @transform_3(%arg0: i32, %arg1: i32) -> (i32, i32) {
    %c0_i32 = arith.constant 0 : i32
    %c0_i32_0 = arith.constant 0 : i32
    return %c0_i32, %arg1 : i32, i32
  }
  func.func @transform_4(%arg0: i32, %arg1: i32) -> (i32, i32) {
    %c0_i32 = arith.constant 0 : i32
    return %arg0, %arg1 : i32, i32
  }
}

module attributes {stable_mosaic.version = 11 : i64} {
  func.func @_matmul_bias_kernel(%arg0: i32, %arg1: i32, %arg2: memref<98x144xbf16, #tpu.memory_space<vmem>>, %arg3: memref<144x128xbf16, #tpu.memory_space<vmem>>, %arg4: memref<1x128xf32, #tpu.memory_space<vmem>>, %arg5: memref<1x128xf32, #tpu.memory_space<vmem>>, %arg6: memref<98x128xf32, #tpu.memory_space<vmem>>) attributes {dimension_semantics = [#tpu.dimension_semantics<parallel>, #tpu.dimension_semantics<parallel>], iteration_bounds = array<i64: 1, 1>, scalar_prefetch = 0 : i64, scratch_operands = 0 : i64, tpu.core_type = #tpu.core_type<tc>, window_params = [{transform_indices = @transform_0, window_bounds = array<i64: 98, 144>}, {transform_indices = @transform_1, window_bounds = array<i64: 144, 128>}, {transform_indices = @transform_2, window_bounds = array<i64: 1, 128>}, {transform_indices = @transform_3, window_bounds = array<i64: 1, 128>}, {transform_indices = @transform_4, window_bounds = array<i64: 98, 128>}]} {
    %c0 = arith.constant 0 : index
    %c0_0 = arith.constant 0 : index
    %0 = vector.load %arg2[%c0, %c0_0] : memref<98x144xbf16, #tpu.memory_space<vmem>>, vector<98x144xbf16>
    %c0_1 = arith.constant 0 : index
    %c0_2 = arith.constant 0 : index
    %1 = vector.load %arg3[%c0_1, %c0_2] : memref<144x128xbf16, #tpu.memory_space<vmem>>, vector<144x128xbf16>
    %cst = arith.constant dense<0.000000e+00> : vector<98x128xf32>
    %2 = tpu.matmul %0, %1, %cst {dimension_numbers = #tpu.dot_dimension_numbers<[1], [0], [0], [1], [0, 0, 1, 1], [], []>} : vector<98x144xbf16>, vector<144x128xbf16>, vector<98x128xf32> -> vector<98x128xf32>
    %c0_3 = arith.constant 0 : index
    %c0_4 = arith.constant 0 : index
    %3 = vector.load %arg4[%c0_3, %c0_4] : memref<1x128xf32, #tpu.memory_space<vmem>>, vector<1x128xf32>
    %4 = vector.broadcast %3 : vector<1x128xf32> to vector<98x128xf32>
    %5 = arith.mulf %2, %4 : vector<98x128xf32>
    %c0_5 = arith.constant 0 : index
    %c0_6 = arith.constant 0 : index
    %6 = vector.load %arg5[%c0_5, %c0_6] : memref<1x128xf32, #tpu.memory_space<vmem>>, vector<1x128xf32>
    %7 = vector.broadcast %6 : vector<1x128xf32> to vector<98x128xf32>
    %8 = arith.addf %5, %7 : vector<98x128xf32>
    %cst_7 = arith.constant 0.000000e+00 : f32
    %9 = vector.broadcast %cst_7 : f32 to vector<98x128xf32>
    %10 = arith.maximumf %8, %9 : vector<98x128xf32>
    %c0_8 = arith.constant 0 : index
    %c0_9 = arith.constant 0 : index
    %11 = vector.load %arg6[%c0_8, %c0_9] : memref<98x128xf32, #tpu.memory_space<vmem>>, vector<98x128xf32>
    tpu.vector_store %arg6[%c0_8, %c0_9], %10 {strides = array<i32>} : memref<98x128xf32, #tpu.memory_space<vmem>>, vector<98x128xf32>,
    return
  }
  func.func @transform_0(%arg0: i32, %arg1: i32) -> (i32, i32) {
    %c0_i32 = arith.constant 0 : i32
    %c0_i32_0 = arith.constant 0 : i32
    return %arg0, %c0_i32 : i32, i32
  }
  func.func @transform_1(%arg0: i32, %arg1: i32) -> (i32, i32) {
    %c0_i32 = arith.constant 0 : i32
    %c0_i32_0 = arith.constant 0 : i32
    return %c0_i32, %arg1 : i32, i32
  }
  func.func @transform_2(%arg0: i32, %arg1: i32) -> (i32, i32) {
    %c0_i32 = arith.constant 0 : i32
    %c0_i32_0 = arith.constant 0 : i32
    return %c0_i32, %arg1 : i32, i32
  }
  func.func @transform_3(%arg0: i32, %arg1: i32) -> (i32, i32) {
    %c0_i32 = arith.constant 0 : i32
    %c0_i32_0 = arith.constant 0 : i32
    return %c0_i32, %arg1 : i32, i32
  }
  func.func @transform_4(%arg0: i32, %arg1: i32) -> (i32, i32) {
    %c0_i32 = arith.constant 0 : i32
    return %arg0, %arg1 : i32, i32
  }
}

module attributes {stable_mosaic.version = 11 : i64} {
  func.func @_matmul_bias_kernel(%arg0: i32, %arg1: i32, %arg2: memref<28x16xbf16, #tpu.memory_space<vmem>>, %arg3: memref<16x128xbf16, #tpu.memory_space<vmem>>, %arg4: memref<1x128xf32, #tpu.memory_space<vmem>>, %arg5: memref<1x128xf32, #tpu.memory_space<vmem>>, %arg6: memref<28x128xf32, #tpu.memory_space<vmem>>) attributes {dimension_semantics = [#tpu.dimension_semantics<parallel>, #tpu.dimension_semantics<parallel>], iteration_bounds = array<i64: 1, 1>, scalar_prefetch = 0 : i64, scratch_operands = 0 : i64, tpu.core_type = #tpu.core_type<tc>, window_params = [{transform_indices = @transform_0, window_bounds = array<i64: 28, 16>}, {transform_indices = @transform_1, window_bounds = array<i64: 16, 128>}, {transform_indices = @transform_2, window_bounds = array<i64: 1, 128>}, {transform_indices = @transform_3, window_bounds = array<i64: 1, 128>}, {transform_indices = @transform_4, window_bounds = array<i64: 28, 128>}]} {
    %c0 = arith.constant 0 : index
    %c0_0 = arith.constant 0 : index
    %0 = vector.load %arg2[%c0, %c0_0] : memref<28x16xbf16, #tpu.memory_space<vmem>>, vector<28x16xbf16>
    %c0_1 = arith.constant 0 : index
    %c0_2 = arith.constant 0 : index
    %1 = vector.load %arg3[%c0_1, %c0_2] : memref<16x128xbf16, #tpu.memory_space<vmem>>, vector<16x128xbf16>
    %cst = arith.constant dense<0.000000e+00> : vector<28x128xf32>
    %2 = tpu.matmul %0, %1, %cst {dimension_numbers = #tpu.dot_dimension_numbers<[1], [0], [0], [1], [0, 0, 1, 1], [], []>} : vector<28x16xbf16>, vector<16x128xbf16>, vector<28x128xf32> -> vector<28x128xf32>
    %c0_3 = arith.constant 0 : index
    %c0_4 = arith.constant 0 : index
    %3 = vector.load %arg4[%c0_3, %c0_4] : memref<1x128xf32, #tpu.memory_space<vmem>>, vector<1x128xf32>
    %4 = vector.broadcast %3 : vector<1x128xf32> to vector<28x128xf32>
    %5 = arith.mulf %2, %4 : vector<28x128xf32>
    %c0_5 = arith.constant 0 : index
    %c0_6 = arith.constant 0 : index
    %6 = vector.load %arg5[%c0_5, %c0_6] : memref<1x128xf32, #tpu.memory_space<vmem>>, vector<1x128xf32>
    %7 = vector.broadcast %6 : vector<1x128xf32> to vector<28x128xf32>
    %8 = arith.addf %5, %7 : vector<28x128xf32>
    %c0_7 = arith.constant 0 : index
    %c0_8 = arith.constant 0 : index
    %9 = vector.load %arg6[%c0_7, %c0_8] : memref<28x128xf32, #tpu.memory_space<vmem>>, vector<28x128xf32>
    tpu.vector_store %arg6[%c0_7, %c0_8], %8 {strides = array<i32>} : memref<28x128xf32, #tpu.memory_space<vmem>>, vector<28x128xf32>,
    return
  }
  func.func @transform_0(%arg0: i32, %arg1: i32) -> (i32, i32) {
    %c0_i32 = arith.constant 0 : i32
    %c0_i32_0 = arith.constant 0 : i32
    return %arg0, %c0_i32 : i32, i32
  }
  func.func @transform_1(%arg0: i32, %arg1: i32) -> (i32, i32) {
    %c0_i32 = arith.constant 0 : i32
    %c0_i32_0 = arith.constant 0 : i32
    return %c0_i32, %arg1 : i32, i32
  }
  func.func @transform_2(%arg0: i32, %arg1: i32) -> (i32, i32) {
    %c0_i32 = arith.constant 0 : i32
    %c0_i32_0 = arith.constant 0 : i32
    return %c0_i32, %arg1 : i32, i32
  }
  func.func @transform_3(%arg0: i32, %arg1: i32) -> (i32, i32) {
    %c0_i32 = arith.constant 0 : i32
    %c0_i32_0 = arith.constant 0 : i32
    return %c0_i32, %arg1 : i32, i32
  }
  func.func @transform_4(%arg0: i32, %arg1: i32) -> (i32, i32) {
    %c0_i32 = arith.constant 0 : i32
    return %arg0, %arg1 : i32, i32
  }
}

module attributes {stable_mosaic.version = 11 : i64} {
  func.func @_matmul_bias_kernel(%arg0: i32, %arg1: i32, %arg2: memref<98x16xbf16, #tpu.memory_space<vmem>>, %arg3: memref<16x128xbf16, #tpu.memory_space<vmem>>, %arg4: memref<1x128xf32, #tpu.memory_space<vmem>>, %arg5: memref<1x128xf32, #tpu.memory_space<vmem>>, %arg6: memref<98x128xf32, #tpu.memory_space<vmem>>) attributes {dimension_semantics = [#tpu.dimension_semantics<parallel>, #tpu.dimension_semantics<parallel>], iteration_bounds = array<i64: 1, 1>, scalar_prefetch = 0 : i64, scratch_operands = 0 : i64, tpu.core_type = #tpu.core_type<tc>, window_params = [{transform_indices = @transform_0, window_bounds = array<i64: 98, 16>}, {transform_indices = @transform_1, window_bounds = array<i64: 16, 128>}, {transform_indices = @transform_2, window_bounds = array<i64: 1, 128>}, {transform_indices = @transform_3, window_bounds = array<i64: 1, 128>}, {transform_indices = @transform_4, window_bounds = array<i64: 98, 128>}]} {
    %c0 = arith.constant 0 : index
    %c0_0 = arith.constant 0 : index
    %0 = vector.load %arg2[%c0, %c0_0] : memref<98x16xbf16, #tpu.memory_space<vmem>>, vector<98x16xbf16>
    %c0_1 = arith.constant 0 : index
    %c0_2 = arith.constant 0 : index
    %1 = vector.load %arg3[%c0_1, %c0_2] : memref<16x128xbf16, #tpu.memory_space<vmem>>, vector<16x128xbf16>
    %cst = arith.constant dense<0.000000e+00> : vector<98x128xf32>
    %2 = tpu.matmul %0, %1, %cst {dimension_numbers = #tpu.dot_dimension_numbers<[1], [0], [0], [1], [0, 0, 1, 1], [], []>} : vector<98x16xbf16>, vector<16x128xbf16>, vector<98x128xf32> -> vector<98x128xf32>
    %c0_3 = arith.constant 0 : index
    %c0_4 = arith.constant 0 : index
    %3 = vector.load %arg4[%c0_3, %c0_4] : memref<1x128xf32, #tpu.memory_space<vmem>>, vector<1x128xf32>
    %4 = vector.broadcast %3 : vector<1x128xf32> to vector<98x128xf32>
    %5 = arith.mulf %2, %4 : vector<98x128xf32>
    %c0_5 = arith.constant 0 : index
    %c0_6 = arith.constant 0 : index
    %6 = vector.load %arg5[%c0_5, %c0_6] : memref<1x128xf32, #tpu.memory_space<vmem>>, vector<1x128xf32>
    %7 = vector.broadcast %6 : vector<1x128xf32> to vector<98x128xf32>
    %8 = arith.addf %5, %7 : vector<98x128xf32>
    %c0_7 = arith.constant 0 : index
    %c0_8 = arith.constant 0 : index
    %9 = vector.load %arg6[%c0_7, %c0_8] : memref<98x128xf32, #tpu.memory_space<vmem>>, vector<98x128xf32>
    tpu.vector_store %arg6[%c0_7, %c0_8], %8 {strides = array<i32>} : memref<98x128xf32, #tpu.memory_space<vmem>>, vector<98x128xf32>,
    return
  }
  func.func @transform_0(%arg0: i32, %arg1: i32) -> (i32, i32) {
    %c0_i32 = arith.constant 0 : i32
    %c0_i32_0 = arith.constant 0 : i32
    return %arg0, %c0_i32 : i32, i32
  }
  func.func @transform_1(%arg0: i32, %arg1: i32) -> (i32, i32) {
    %c0_i32 = arith.constant 0 : i32
    %c0_i32_0 = arith.constant 0 : i32
    return %c0_i32, %arg1 : i32, i32
  }
  func.func @transform_2(%arg0: i32, %arg1: i32) -> (i32, i32) {
    %c0_i32 = arith.constant 0 : i32
    %c0_i32_0 = arith.constant 0 : i32
    return %c0_i32, %arg1 : i32, i32
  }
  func.func @transform_3(%arg0: i32, %arg1: i32) -> (i32, i32) {
    %c0_i32 = arith.constant 0 : i32
    %c0_i32_0 = arith.constant 0 : i32
    return %c0_i32, %arg1 : i32, i32
  }
  func.func @transform_4(%arg0: i32, %arg1: i32) -> (i32, i32) {
    %c0_i32 = arith.constant 0 : i32
    return %arg0, %arg1 : i32, i32
  }
}

module attributes {stable_mosaic.version = 11 : i64} {
  func.func @_matmul_bias_kernel(%arg0: i32, %arg1: i32, %arg2: memref<32x49xbf16, #tpu.memory_space<vmem>>, %arg3: memref<49x1536xbf16, #tpu.memory_space<vmem>>, %arg4: memref<1x1536xf32, #tpu.memory_space<vmem>>, %arg5: memref<1x1536xf32, #tpu.memory_space<vmem>>, %arg6: memref<32x1536xbf16, #tpu.memory_space<vmem>>) attributes {dimension_semantics = [#tpu.dimension_semantics<parallel>, #tpu.dimension_semantics<parallel>], iteration_bounds = array<i64: 1, 1>, scalar_prefetch = 0 : i64, scratch_operands = 0 : i64, tpu.core_type = #tpu.core_type<tc>, window_params = [{transform_indices = @transform_0, window_bounds = array<i64: 32, 49>}, {transform_indices = @transform_1, window_bounds = array<i64: 49, 1536>}, {transform_indices = @transform_2, window_bounds = array<i64: 1, 1536>}, {transform_indices = @transform_3, window_bounds = array<i64: 1, 1536>}, {transform_indices = @transform_4, window_bounds = array<i64: 32, 1536>}]} {
    %c0 = arith.constant 0 : index
    %c0_0 = arith.constant 0 : index
    %0 = vector.load %arg2[%c0, %c0_0] : memref<32x49xbf16, #tpu.memory_space<vmem>>, vector<32x49xbf16>
    %c0_1 = arith.constant 0 : index
    %c0_2 = arith.constant 0 : index
    %1 = vector.load %arg3[%c0_1, %c0_2] : memref<49x1536xbf16, #tpu.memory_space<vmem>>, vector<49x1536xbf16>
    %cst = arith.constant dense<0.000000e+00> : vector<32x1536xf32>
    %2 = tpu.matmul %0, %1, %cst {dimension_numbers = #tpu.dot_dimension_numbers<[1], [0], [0], [1], [0, 0, 1, 1], [], []>} : vector<32x49xbf16>, vector<49x1536xbf16>, vector<32x1536xf32> -> vector<32x1536xf32>
    %c0_3 = arith.constant 0 : index
    %c0_4 = arith.constant 0 : index
    %3 = vector.load %arg4[%c0_3, %c0_4] : memref<1x1536xf32, #tpu.memory_space<vmem>>, vector<1x1536xf32>
    %4 = vector.broadcast %3 : vector<1x1536xf32> to vector<32x1536xf32>
    %5 = arith.mulf %2, %4 : vector<32x1536xf32>
    %c0_5 = arith.constant 0 : index
    %c0_6 = arith.constant 0 : index
    %6 = vector.load %arg5[%c0_5, %c0_6] : memref<1x1536xf32, #tpu.memory_space<vmem>>, vector<1x1536xf32>
    %7 = vector.broadcast %6 : vector<1x1536xf32> to vector<32x1536xf32>
    %8 = arith.addf %5, %7 : vector<32x1536xf32>
    %9 = arith.truncf %8 : vector<32x1536xf32> to vector<32x1536xbf16>
    %c0_7 = arith.constant 0 : index
    %c0_8 = arith.constant 0 : index
    %10 = vector.load %arg6[%c0_7, %c0_8] : memref<32x1536xbf16, #tpu.memory_space<vmem>>, vector<32x1536xbf16>
    tpu.vector_store %arg6[%c0_7, %c0_8], %9 {strides = array<i32>} : memref<32x1536xbf16, #tpu.memory_space<vmem>>, vector<32x1536xbf16>,
    return
  }
  func.func @transform_0(%arg0: i32, %arg1: i32) -> (i32, i32) {
    %c0_i32 = arith.constant 0 : i32
    %c0_i32_0 = arith.constant 0 : i32
    return %arg0, %c0_i32 : i32, i32
  }
  func.func @transform_1(%arg0: i32, %arg1: i32) -> (i32, i32) {
    %c0_i32 = arith.constant 0 : i32
    %c0_i32_0 = arith.constant 0 : i32
    return %c0_i32, %arg1 : i32, i32
  }
  func.func @transform_2(%arg0: i32, %arg1: i32) -> (i32, i32) {
    %c0_i32 = arith.constant 0 : i32
    %c0_i32_0 = arith.constant 0 : i32
    return %c0_i32, %arg1 : i32, i32
  }
  func.func @transform_3(%arg0: i32, %arg1: i32) -> (i32, i32) {
    %c0_i32 = arith.constant 0 : i32
    %c0_i32_0 = arith.constant 0 : i32
    return %c0_i32, %arg1 : i32, i32
  }
  func.func @transform_4(%arg0: i32, %arg1: i32) -> (i32, i32) {
    %c0_i32 = arith.constant 0 : i32
    return %arg0, %arg1 : i32, i32
  }
}

module attributes {stable_mosaic.version = 11 : i64} {
  func.func @_attn_kernel(%arg0: i32, %arg1: memref<16x16x64xbf16, #tpu.memory_space<vmem>>, %arg2: memref<16x16x64xbf16, #tpu.memory_space<vmem>>, %arg3: memref<16x16x64xbf16, #tpu.memory_space<vmem>>, %arg4: memref<16x16x64xbf16, #tpu.memory_space<vmem>>) attributes {dimension_semantics = [#tpu.dimension_semantics<parallel>], iteration_bounds = array<i64: 1>, scalar_prefetch = 0 : i64, scratch_operands = 0 : i64, tpu.core_type = #tpu.core_type<tc>, window_params = [{transform_indices = @transform_0, window_bounds = array<i64: 16, 16, 64>}, {transform_indices = @transform_1, window_bounds = array<i64: 16, 16, 64>}, {transform_indices = @transform_2, window_bounds = array<i64: 16, 16, 64>}, {transform_indices = @transform_3, window_bounds = array<i64: 16, 16, 64>}]} {
    %c0 = arith.constant 0 : index
    %c0_0 = arith.constant 0 : index
    %c0_1 = arith.constant 0 : index
    %0 = vector.load %arg1[%c0, %c0_0, %c0_1] : memref<16x16x64xbf16, #tpu.memory_space<vmem>>, vector<16x16x64xbf16>
    %c0_2 = arith.constant 0 : index
    %c0_3 = arith.constant 0 : index
    %c0_4 = arith.constant 0 : index
    %1 = vector.load %arg2[%c0_2, %c0_3, %c0_4] : memref<16x16x64xbf16, #tpu.memory_space<vmem>>, vector<16x16x64xbf16>
    "tpu.trace_start"() <{level = 10 : i32, message = "bqd,bkd->bqk"}> : () -> ()
    %cst = arith.constant dense<0.000000e+00> : vector<16x16x16xf32>
    %2 = tpu.matmul %0, %1, %cst {dimension_numbers = #tpu.dot_dimension_numbers<[2], [2], [1], [1], [0, 0, 0, 1, 1, 1], [0], [0]>} : vector<16x16x64xbf16>, vector<16x16x64xbf16>, vector<16x16x16xf32> -> vector<16x16x16xf32>
    "tpu.trace_stop"() : () -> ()
    %cst_5 = arith.constant 1.250000e-01 : f32
    %3 = vector.broadcast %cst_5 : f32 to vector<16x16x16xf32>
    %4 = arith.mulf %2, %3 : vector<16x16x16xf32>
    %cst_6 = arith.constant dense<0xFF800000> : vector<16x16xf32>
    %5 = vector.multi_reduction <maximumf>, %4, %cst_6 [2] : vector<16x16x16xf32> to vector<16x16xf32>
    %6 = vector.shape_cast %5 : vector<16x16xf32> to vector<16x16x1xf32>
    %7 = vector.broadcast %6 : vector<16x16x1xf32> to vector<16x16x16xf32>
    %8 = arith.subf %4, %7 : vector<16x16x16xf32>
    %9 = math.exp %8 : vector<16x16x16xf32>
    %cst_7 = arith.constant dense<0.000000e+00> : vector<16x16xf32>
    %10 = vector.multi_reduction <add>, %9, %cst_7 [2] : vector<16x16x16xf32> to vector<16x16xf32>
    %11 = vector.shape_cast %10 : vector<16x16xf32> to vector<16x16x1xf32>
    %12 = tpu.reciprocal %11 {approx = true} : vector<16x16x1xf32> -> vector<16x16x1xf32>
    %13 = vector.broadcast %12 : vector<16x16x1xf32> to vector<16x16x16xf32>
    %14 = arith.mulf %9, %13 : vector<16x16x16xf32>
    %15 = arith.truncf %14 : vector<16x16x16xf32> to vector<16x16x16xbf16>
    %c0_8 = arith.constant 0 : index
    %c0_9 = arith.constant 0 : index
    %c0_10 = arith.constant 0 : index
    %16 = vector.load %arg3[%c0_8, %c0_9, %c0_10] : memref<16x16x64xbf16, #tpu.memory_space<vmem>>, vector<16x16x64xbf16>
    "tpu.trace_start"() <{level = 10 : i32, message = "bqk,bkd->bqd"}> : () -> ()
    %cst_11 = arith.constant dense<0.000000e+00> : vector<16x16x64xf32>
    %17 = tpu.matmul %15, %16, %cst_11 {dimension_numbers = #tpu.dot_dimension_numbers<[2], [1], [1], [2], [0, 0, 0, 1, 1, 2], [0], [0]>} : vector<16x16x16xbf16>, vector<16x16x64xbf16>, vector<16x16x64xf32> -> vector<16x16x64xf32>
    "tpu.trace_stop"() : () -> ()
    %18 = arith.truncf %17 : vector<16x16x64xf32> to vector<16x16x64xbf16>
    %c0_12 = arith.constant 0 : index
    %c0_13 = arith.constant 0 : index
    %c0_14 = arith.constant 0 : index
    %19 = vector.load %arg4[%c0_12, %c0_13, %c0_14] : memref<16x16x64xbf16, #tpu.memory_space<vmem>>, vector<16x16x64xbf16>
    tpu.vector_store %arg4[%c0_12, %c0_13, %c0_14], %18 {strides = array<i32>} : memref<16x16x64xbf16, #tpu.memory_space<vmem>>, vector<16x16x64xbf16>,
    return
  }
  func.func @transform_0(%arg0: i32) -> (i32, i32, i32) {
    %c0_i32 = arith.constant 0 : i32
    %c0_i32_0 = arith.constant 0 : i32
    %c0_i32_1 = arith.constant 0 : i32
    return %arg0, %c0_i32, %c0_i32_0 : i32, i32, i32
  }
  func.func @transform_1(%arg0: i32) -> (i32, i32, i32) {
    %c0_i32 = arith.constant 0 : i32
    %c0_i32_0 = arith.constant 0 : i32
    %c0_i32_1 = arith.constant 0 : i32
    return %arg0, %c0_i32, %c0_i32_0 : i32, i32, i32
  }
  func.func @transform_2(%arg0: i32) -> (i32, i32, i32) {
    %c0_i32 = arith.constant 0 : i32
    %c0_i32_0 = arith.constant 0 : i32
    %c0_i32_1 = arith.constant 0 : i32
    return %arg0, %c0_i32, %c0_i32_0 : i32, i32, i32
  }
  func.func @transform_3(%arg0: i32) -> (i32, i32, i32) {
    %c0_i32 = arith.constant 0 : i32
    %c0_i32_0 = arith.constant 0 : i32
    %c0_i32_1 = arith.constant 0 : i32
    return %arg0, %c0_i32, %c0_i32_0 : i32, i32, i32
  }
}

module attributes {stable_mosaic.version = 11 : i64} {
  func.func @_matmul_bias_kernel(%arg0: i32, %arg1: i32, %arg2: memref<32x512xbf16, #tpu.memory_space<vmem>>, %arg3: memref<512x128xbf16, #tpu.memory_space<vmem>>, %arg4: memref<1x128xf32, #tpu.memory_space<vmem>>, %arg5: memref<1x128xf32, #tpu.memory_space<vmem>>, %arg6: memref<32x128xf32, #tpu.memory_space<vmem>>) attributes {dimension_semantics = [#tpu.dimension_semantics<parallel>, #tpu.dimension_semantics<parallel>], iteration_bounds = array<i64: 1, 1>, scalar_prefetch = 0 : i64, scratch_operands = 0 : i64, tpu.core_type = #tpu.core_type<tc>, window_params = [{transform_indices = @transform_0, window_bounds = array<i64: 32, 512>}, {transform_indices = @transform_1, window_bounds = array<i64: 512, 128>}, {transform_indices = @transform_2, window_bounds = array<i64: 1, 128>}, {transform_indices = @transform_3, window_bounds = array<i64: 1, 128>}, {transform_indices = @transform_4, window_bounds = array<i64: 32, 128>}]} {
    %c0 = arith.constant 0 : index
    %c0_0 = arith.constant 0 : index
    %0 = vector.load %arg2[%c0, %c0_0] : memref<32x512xbf16, #tpu.memory_space<vmem>>, vector<32x512xbf16>
    %c0_1 = arith.constant 0 : index
    %c0_2 = arith.constant 0 : index
    %1 = vector.load %arg3[%c0_1, %c0_2] : memref<512x128xbf16, #tpu.memory_space<vmem>>, vector<512x128xbf16>
    %cst = arith.constant dense<0.000000e+00> : vector<32x128xf32>
    %2 = tpu.matmul %0, %1, %cst {dimension_numbers = #tpu.dot_dimension_numbers<[1], [0], [0], [1], [0, 0, 1, 1], [], []>} : vector<32x512xbf16>, vector<512x128xbf16>, vector<32x128xf32> -> vector<32x128xf32>
    %c0_3 = arith.constant 0 : index
    %c0_4 = arith.constant 0 : index
    %3 = vector.load %arg4[%c0_3, %c0_4] : memref<1x128xf32, #tpu.memory_space<vmem>>, vector<1x128xf32>
    %4 = vector.broadcast %3 : vector<1x128xf32> to vector<32x128xf32>
    %5 = arith.mulf %2, %4 : vector<32x128xf32>
    %c0_5 = arith.constant 0 : index
    %c0_6 = arith.constant 0 : index
    %6 = vector.load %arg5[%c0_5, %c0_6] : memref<1x128xf32, #tpu.memory_space<vmem>>, vector<1x128xf32>
    %7 = vector.broadcast %6 : vector<1x128xf32> to vector<32x128xf32>
    %8 = arith.addf %5, %7 : vector<32x128xf32>
    %c0_7 = arith.constant 0 : index
    %c0_8 = arith.constant 0 : index
    %9 = vector.load %arg6[%c0_7, %c0_8] : memref<32x128xf32, #tpu.memory_space<vmem>>, vector<32x128xf32>
    tpu.vector_store %arg6[%c0_7, %c0_8], %8 {strides = array<i32>} : memref<32x128xf32, #tpu.memory_space<vmem>>, vector<32x128xf32>,
    return
  }
  func.func @transform_0(%arg0: i32, %arg1: i32) -> (i32, i32) {
    %c0_i32 = arith.constant 0 : i32
    %c0_i32_0 = arith.constant 0 : i32
    return %arg0, %c0_i32 : i32, i32
  }
  func.func @transform_1(%arg0: i32, %arg1: i32) -> (i32, i32) {
    %c0_i32 = arith.constant 0 : i32
    %c0_i32_0 = arith.constant 0 : i32
    return %c0_i32, %arg1 : i32, i32
  }
  func.func @transform_2(%arg0: i32, %arg1: i32) -> (i32, i32) {
    %c0_i32 = arith.constant 0 : i32
    %c0_i32_0 = arith.constant 0 : i32
    return %c0_i32, %arg1 : i32, i32
  }
  func.func @transform_3(%arg0: i32, %arg1: i32) -> (i32, i32) {
    %c0_i32 = arith.constant 0 : i32
    %c0_i32_0 = arith.constant 0 : i32
    return %c0_i32, %arg1 : i32, i32
  }
  func.func @transform_4(%arg0: i32, %arg1: i32) -> (i32, i32) {
    %c0_i32 = arith.constant 0 : i32
    return %arg0, %arg1 : i32, i32
  }
}

</mosaic_0001>

<llo_original>
// kernel: mul.115
$region0: #{mul.115}
  %s0 = inlined_call_operand.vmem [shape: f32[14,16], index: 0, kind: input, shape index: {}]
  %s1 = inlined_call_operand.vmem [shape: f32[2,7,16], index: 1, kind: output, shape index: {}]
  %v2 = vld [vmem:[%s0] sm:$0xff]
  %vm3 = vcmask 130048
  %4 = vst.msk [vmem:[%s1] sm:$0x7f] %vm3, %v2
  %s5 = scalar_lea.vmem %s1, 1
  %6 = vst.msk [vmem:[%s5] sm:$0x80] %vm3, %v2
  %s7 = scalar_lea.vmem %s0, 8
  %v8 = vld [vmem:[%s7] sm:$0x3f]
  %vm9 = vcmask 130048
  %s10 = scalar_lea.vmem %s1, 9
  %11 = vst.msk [vmem:[%s10] sm:$0x3f] %vm9, %v8

// kernel: mul.116
$region0: #{mul.116}
  #allocation0 [shape = 's32[1]{0}', space=sflag, size = 0x4, scoped, tag = 'scoped memory for mul.116']
  %s0 = inlined_call_operand.vmem [shape: f32[2,7,16], index: 0, kind: input, shape index: {}]
  %s1 = inlined_call_operand.vmem [shape: f32[2,7,7,16], index: 1, kind: output, shape index: {}]
  // Predicated region
  $region2: #{mul.116} parent=0 // pred_check
    _
  $region3: #{mul.116} parent=0 // pred_check_branch
    %3 = sbr.rel (0) target = $region5
  $region4: #{mul.116} parent=0 // pred_region
    _
  $region5: #{mul.116} parent=0 // pred_fallthru
    _
  %v4 = vld [vmem:[%s0] ss:$0 sm:$0xff]
  %5 = vst [vmem:[%s1] sm:$0xff] %v4
  %s6 = scalar_lea.vmem %s0, 8
  %v7 = vld [vmem:[%s6] ss:$0 sm:$0xff]
  %s8 = scalar_lea.vmem %s1, 56
  %9 = vst [vmem:[%s8] sm:$0xff] %v7
  %s10 = scalar_lea.vmem %s0, 1
  %v11 = vld [vmem:[%s10] ss:$0 sm:$0xff]
  %s12 = scalar_lea.vmem %s1, 8
  %13 = vst [vmem:[%s12] sm:$0xff] %v11
  %s14 = scalar_lea.vmem %s0, 8
  %s15 = scalar_lea.vmem %s14, 1
  %v16 = vld [vmem:[%s15] ss:$0 sm:$0xff]
  %s17 = scalar_lea.vmem %s1, 64
  %18 = vst [vmem:[%s17] sm:$0xff] %v16
  %s19 = scalar_lea.vmem %s0, 2
  %v20 = vld [vmem:[%s19] ss:$0 sm:$0xff]
  %s21 = scalar_lea.vmem %s1, 16
  %22 = vst [vmem:[%s21] sm:$0xff] %v20
  %s23 = scalar_lea.vmem %s0, 8
  %s24 = scalar_lea.vmem %s23, 2
  %v25 = vld [vmem:[%s24] ss:$0 sm:$0xff]
  %s26 = scalar_lea.vmem %s1, 72
  %27 = vst [vmem:[%s26] sm:$0xff] %v25
  %s28 = scalar_lea.vmem %s0, 3
  %v29 = vld [vmem:[%s28] ss:$0 sm:$0xff]
  %s30 = scalar_lea.vmem %s1, 24
  %31 = vst [vmem:[%s30] sm:$0xff] %v29
  %s32 = scalar_lea.vmem %s0, 8
  %s33 = scalar_lea.vmem %s32, 3
  %v34 = vld [vmem:[%s33] ss:$0 sm:$0xff]
  %s35 = scalar_lea.vmem %s1, 80
  %36 = vst [vmem:[%s35] sm:$0xff] %v34
  %s37 = scalar_lea.vmem %s0, 4
  %v38 = vld [vmem:[%s37] ss:$0 sm:$0xff]
  %s39 = scalar_lea.vmem %s1, 32
  %40 = vst [vmem:[%s39] sm:$0xff] %v38
  %s41 = scalar_lea.vmem %s0, 8
  %s42 = scalar_lea.vmem %s41, 4
  %v43 = vld [vmem:[%s42] ss:$0 sm:$0xff]
  %s44 = scalar_lea.vmem %s1, 88
  %45 = vst [vmem:[%s44] sm:$0xff] %v43
  %s46 = scalar_lea.vmem %s0, 5
  %v47 = vld [vmem:[%s46] ss:$0 sm:$0xff]
  %s48 = scalar_lea.vmem %s1, 40
  %49 = vst [vmem:[%s48] sm:$0xff] %v47
  %s50 = scalar_lea.vmem %s0, 8
  %s51 = scalar_lea.vmem %s50, 5
  %v52 = vld [vmem:[%s51] ss:$0 sm:$0xff]
  %s53 = scalar_lea.vmem %s1, 96
  %54 = vst [vmem:[%s53] sm:$0xff] %v52
  %s55 = scalar_lea.vmem %s0, 6
  %v56 = vld [vmem:[%s55] ss:$0 sm:$0xff]
  %s57 = scalar_lea.vmem %s1, 48
  %58 = vst [vmem:[%s57] sm:$0xff] %v56
  %s59 = scalar_lea.vmem %s0, 8
  %s60 = scalar_lea.vmem %s59, 6
  %v61 = vld [vmem:[%s60] ss:$0 sm:$0xff]
  %s62 = scalar_lea.vmem %s1, 104
  %63 = vst [vmem:[%s62] sm:$0xff] %v61

// kernel: mul.119
$region0: #{mul.119}
  #allocation0 [shape = 's32[1]{0}', space=sflag, size = 0x4, scoped, tag = 'scoped memory for mul.119']
  %s0 = inlined_call_operand.vmem [shape: f32[2,7,16], index: 0, kind: input, shape index: {}]
  %s1 = inlined_call_operand.vmem [shape: f32[2,7,7,16], index: 1, kind: output, shape index: {}]
  // Predicated region
  $region2: #{mul.119} parent=0 // pred_check
    _
  $region3: #{mul.119} parent=0 // pred_check_branch
    %3 = sbr.rel (0) target = $region5
  $region4: #{mul.119} parent=0 // pred_region
    _
  $region5: #{mul.119} parent=0 // pred_fallthru
    _
  %v4 = vld [vmem:[%s0] sm:$0x7f]
  %5 = vst [vmem:[%s1] sm:$0xff] %v4
  %s6 = scalar_lea.vmem %s0, 8
  %v7 = vld [vmem:[%s6] sm:$0x7f]
  %s8 = scalar_lea.vmem %s1, 56
  %9 = vst [vmem:[%s8] sm:$0xff] %v7
  %s10 = scalar_lea.vmem %s1, 8
  %11 = vst [vmem:[%s10] sm:$0xff] %v4
  %s12 = scalar_lea.vmem %s1, 64
  %13 = vst [vmem:[%s12] sm:$0xff] %v7
  %s14 = scalar_lea.vmem %s1, 16
  %15 = vst [vmem:[%s14] sm:$0xff] %v4
  %s16 = scalar_lea.vmem %s1, 72
  %17 = vst [vmem:[%s16] sm:$0xff] %v7
  %s18 = scalar_lea.vmem %s1, 24
  %19 = vst [vmem:[%s18] sm:$0xff] %v4
  %s20 = scalar_lea.vmem %s1, 80
  %21 = vst [vmem:[%s20] sm:$0xff] %v7
  %s22 = scalar_lea.vmem %s1, 32
  %23 = vst [vmem:[%s22] sm:$0xff] %v4
  %s24 = scalar_lea.vmem %s1, 88
  %25 = vst [vmem:[%s24] sm:$0xff] %v7
  %s26 = scalar_lea.vmem %s1, 40
  %27 = vst [vmem:[%s26] sm:$0xff] %v4
  %s28 = scalar_lea.vmem %s1, 96
  %29 = vst [vmem:[%s28] sm:$0xff] %v7
  %s30 = scalar_lea.vmem %s1, 48
  %31 = vst [vmem:[%s30] sm:$0xff] %v4
  %s32 = scalar_lea.vmem %s1, 104
  %33 = vst [vmem:[%s32] sm:$0xff] %v7

</llo_original>
